<compile_context>
chip_gen: v7x
topology: tpu7x:2x2x1
jax: 0.10.0
libtpu: 0.0.40
codegen_flags: <defaults>
</compile_context>

<pallas_src>
import functools

import jax
import jax.numpy as jnp
from jax import lax
from jax.experimental import pallas as pl
from jax.experimental.pallas import tpu as pltpu


def _round_up(x, m):
    return ((x + m - 1) // m) * m


def _cdiv(a, b):
    return (a + b - 1) // b


# -----------------------------------------------------------------------------
# Kernel
# -----------------------------------------------------------------------------
def _make_kernel(*, tk, repr_dim, feature_dim, feat_pad, k_ragged):
    """Build the kernel with the static tiling configuration baked in."""
    inv_fd = 1.0 / float(feature_dim)

    def kernel(obs_ref,                    # (tb, tk)        bf16
               w1_ref, b1_ref, g_ref, beta_ref,
               w2_ref, b2_ref,
               w3_ref, b3_ref,
               w4_ref, b4_ref,
               out_ref,                    # (tb, act_pad)   f32
               acc_ref):                   # (tb, feat_pad)  f32 scratch
        k = pl.program_id(1)
        last_k = pl.num_programs(1) - 1

        # ---- Linear 1: K-tiled accumulation into the f32 scratch ------------
        @pl.when(k == 0)
        def _():
            acc_ref[...] = jnp.zeros_like(acc_ref)

        if k_ragged:
            # repr_dim % tk != 0: the last obs block overhangs the array; the
            # out-of-bounds columns are undefined, so mask them to zero before
            # feeding the MXU.  (w1 rows are zero-padded once in prepare.)
            @pl.when(k != last_k)
            def _():
                acc_ref[...] += jnp.dot(obs_ref[...], w1_ref[...],
                                        preferred_element_type=jnp.float32)

            @pl.when(k == last_k)
            def _():
                x = obs_ref[...]
                col = lax.broadcasted_iota(jnp.int32, x.shape, 1)
                x = jnp.where(col < (repr_dim - k * tk), x, jnp.zeros_like(x))
                acc_ref[...] += jnp.dot(x, w1_ref[...],
                                        preferred_element_type=jnp.float32)
        else:
            acc_ref[...] += jnp.dot(obs_ref[...], w1_ref[...],
                                    preferred_element_type=jnp.float32)

        # ---- Epilogue on the last K tile (f32 throughout) --------------------
        @pl.when(k == last_k)
        def _():
            h = acc_ref[...] + b1_ref[...]                       # (tb, feat_pad)

            # LayerNorm over the TRUE feature_dim lanes (two-pass variance).
            if feat_pad != feature_dim:
                lane = lax.broadcasted_iota(jnp.int32, h.shape, 1)
                lane_ok = lane < feature_dim
                h = jnp.where(lane_ok, h, 0.0)
                mu = jnp.sum(h, axis=-1, keepdims=True) * inv_fd
                d = h - mu
                var = jnp.sum(jnp.where(lane_ok, d * d, 0.0),
                              axis=-1, keepdims=True) * inv_fd
            else:
                mu = jnp.mean(h, axis=-1, keepdims=True)
                d = h - mu
                var = jnp.mean(d * d, axis=-1, keepdims=True)

            h = d * lax.rsqrt(var + 1e-5)
            # gamma/beta are zero in the padded lanes -> padded lanes become 0.
            h = jnp.tanh(h * g_ref[...] + beta_ref[...])

            # Linear 2 + ReLU (bf16 MXU inputs, f32 accumulate)
            h = jnp.dot(h.astype(jnp.bfloat16), w2_ref[...],
                        preferred_element_type=jnp.float32) + b2_ref[...]
            h = jnp.maximum(h, 0.0)

            # Linear 3 + ReLU
            h = jnp.dot(h.astype(jnp.bfloat16), w3_ref[...],
                        preferred_element_type=jnp.float32) + b3_ref[...]
            h = jnp.maximum(h, 0.0)

            # Linear 4 + Tanh (w4/b4 zero-padded to lane-dense act_pad)
            h = jnp.dot(h.astype(jnp.bfloat16), w4_ref[...],
                        preferred_element_type=jnp.float32) + b4_ref[...]
            out_ref[...] = jnp.tanh(h).astype(out_ref.dtype)

    return kernel


# -----------------------------------------------------------------------------
# One-time parameter preparation (hoisted out of the per-call path)
# -----------------------------------------------------------------------------
def prepare_params(params, *, tk_target=8192):
    """Cast / pad the f32 master params once.  Returns (arrays, meta)."""
    (w1, b1, g, beta, w2, b2, w3, b3, w4, b4) = params
    repr_dim, feature_dim = w1.shape
    hidden_dim = w2.shape[1]
    action_dim = w4.shape[1]

    feat_pad = _round_up(max(feature_dim, 128), 128)
    hid_pad = _round_up(max(hidden_dim, 128), 128)
    act_pad = _round_up(max(action_dim, 128), 128)

    # K (repr_dim) tiling for the first Linear.
    if repr_dim <= tk_target:
        tk, grid_k = repr_dim, 1          # single full-dim tile (always legal)
        k_rows = repr_dim
    else:
        tk = max(128, (tk_target // 128) * 128)
        grid_k = _cdiv(repr_dim, tk)
        k_rows = grid_k * tk              # w1 rows padded once; obs is masked

    def pad2(a, rows, cols, dtype):
        out = jnp.zeros((rows, cols), dtype)
        return out.at[: a.shape[0], : a.shape[1]].set(a.astype(dtype))

    w1_p = pad2(w1, k_rows, feat_pad, jnp.bfloat16)
    w2_p = pad2(w2, feat_pad, hid_pad, jnp.bfloat16)
    w3_p = pad2(w3, hid_pad, hid_pad, jnp.bfloat16)
    w4_p = pad2(w4, hid_pad, act_pad, jnp.bfloat16)

    b1_p = pad2(b1.reshape(1, -1), 1, feat_pad, jnp.float32)
    g_p = pad2(g.reshape(1, -1), 1, feat_pad, jnp.float32)     # pad lanes -> 0
    beta_p = pad2(beta.reshape(1, -1), 1, feat_pad, jnp.float32)
    b2_p = pad2(b2.reshape(1, -1), 1, hid_pad, jnp.float32)
    b3_p = pad2(b3.reshape(1, -1), 1, hid_pad, jnp.float32)
    b4_p = pad2(b4.reshape(1, -1), 1, act_pad, jnp.float32)

    arrays = (w1_p, b1_p, g_p, beta_p, w2_p, b2_p, w3_p, b3_p, w4_p, b4_p)
    meta = dict(repr_dim=repr_dim, feature_dim=feature_dim,
                hidden_dim=hidden_dim, action_dim=action_dim,
                feat_pad=feat_pad, hid_pad=hid_pad, act_pad=act_pad,
                tk=tk, grid_k=grid_k)
    return arrays, meta


# -----------------------------------------------------------------------------
# Forward wrapper
# -----------------------------------------------------------------------------
def actor_forward(obs, prepared, *, tb_target=128):
    """Actor MLP forward.  obs: (batch, repr_dim).  Returns (batch, action_dim) f32."""
    arrays, meta = prepared
    (w1_p, b1_p, g_p, beta_p, w2_p, b2_p, w3_p, b3_p, w4_p, b4_p) = arrays

    batch, repr_dim = obs.shape
    assert repr_dim == meta["repr_dim"]
    feature_dim = meta["feature_dim"]
    feat_pad, hid_pad, act_pad = meta["feat_pad"], meta["hid_pad"], meta["act_pad"]
    tk, grid_k = meta["tk"], meta["grid_k"]
    action_dim = meta["action_dim"]

    # Ideally the encoder already emits bf16; cast here only if it doesn't.
    if obs.dtype != jnp.bfloat16:
        obs = obs.astype(jnp.bfloat16)

    # Batch tiling: sublane aligned, and >=2 tiles when possible so the
    # "parallel" axis actually shards across both TensorCores (v7x).
    tb = min(tb_target, _round_up(batch, 8))
    if batch > 8 and _cdiv(batch, tb) < 2:
        tb = _round_up(_cdiv(batch, 2), 8)
    grid_b = _cdiv(batch, tb)
    b_pad = grid_b * tb
    if b_pad != batch:                       # rare; tiny pad only when needed
        obs = jnp.pad(obs, ((0, b_pad - batch), (0, 0)))

    k_ragged = (grid_k > 1) and (repr_dim % tk != 0)
    kernel = _make_kernel(tk=tk, repr_dim=repr_dim, feature_dim=feature_dim,
                          feat_pad=feat_pad, k_ragged=k_ragged)

    out = pl.pallas_call(
        kernel,
        out_shape=jax.ShapeDtypeStruct((b_pad, act_pad), jnp.float32),
        grid_spec=pltpu.PrefetchScalarGridSpec(
            num_scalar_prefetch=0,
            grid=(grid_b, grid_k),
            in_specs=[
                pl.BlockSpec((tb, tk), lambda b, k: (b, k)),                # obs
                pl.BlockSpec((tk, feat_pad), lambda b, k: (k, 0)),          # w1
                pl.BlockSpec((1, feat_pad), lambda b, k: (0, 0)),           # b1
                pl.BlockSpec((1, feat_pad), lambda b, k: (0, 0)),           # gamma
                pl.BlockSpec((1, feat_pad), lambda b, k: (0, 0)),           # beta
                pl.BlockSpec((feat_pad, hid_pad), lambda b, k: (0, 0)),     # w2
                pl.BlockSpec((1, hid_pad), lambda b, k: (0, 0)),            # b2
                pl.BlockSpec((hid_pad, hid_pad), lambda b, k: (0, 0)),      # w3
                pl.BlockSpec((1, hid_pad), lambda b, k: (0, 0)),            # b3
                pl.BlockSpec((hid_pad, act_pad), lambda b, k: (0, 0)),      # w4
                pl.BlockSpec((1, act_pad), lambda b, k: (0, 0)),            # b4
            ],
            out_specs=pl.BlockSpec((tb, act_pad), lambda b, k: (b, 0)),
            scratch_shapes=[pltpu.VMEM((tb, feat_pad), jnp.float32)],
        ),
        compiler_params=pltpu.CompilerParams(
            dimension_semantics=("parallel", "arbitrary"),
            vmem_limit_bytes=32 * 1024 * 1024,
        ),
    )(obs, w1_p, b1_p, g_p, beta_p, w2_p, b2_p, w3_p, b3_p, w4_p, b4_p)

    return out[:batch, :action_dim]
    # TODO(synk): for per-env-step inference (batch~1) a cross-call weight
    # residency scheme (P10 semaphore/VMEM futures) would remove the per-call
    # weight DMA entirely; out of scope for a single forward kernel.


# -----------------------------------------------------------------------------
# Pure-JAX reference and parameter construction
# -----------------------------------------------------------------------------
def actor_reference(obs, params):
    """Pure-JAX f32 reference mirroring the PyTorch module."""
    (w1, b1, g, beta, w2, b2, w3, b3, w4, b4) = params
    h = obs @ w1 + b1
    mu = jnp.mean(h, axis=-1, keepdims=True)
    var = jnp.mean(jnp.square(h - mu), axis=-1, keepdims=True)
    h = (h - mu) * lax.rsqrt(var + 1e-5)
    h = jnp.tanh(h * g + beta)
    h = jnp.maximum(h @ w2 + b2, 0.0)
    h = jnp.maximum(h @ w3 + b3, 0.0)
    return jnp.tanh(h @ w4 + b4)


def make_params(key, repr_dim, feature_dim, hidden_dim, action_dim):
    """Orthogonal init (mirrors m.orthogonal_init), biases zero; f32 masters."""
    ortho = jax.nn.initializers.orthogonal()
    k1, k2, k3, k4 = jax.random.split(key, 4)
    # Weights stored as (in_features, out_features) == PyTorch weight.T
    w1 = ortho(k1, (repr_dim, feature_dim), jnp.float32)
    w2 = ortho(k2, (feature_dim, hidden_dim), jnp.float32)
    w3 = ortho(k3, (hidden_dim, hidden_dim), jnp.float32)
    w4 = ortho(k4, (hidden_dim, action_dim), jnp.float32)
    b1 = jnp.zeros((1, feature_dim), jnp.float32)
    b2 = jnp.zeros((1, hidden_dim), jnp.float32)
    b3 = jnp.zeros((1, hidden_dim), jnp.float32)
    b4 = jnp.zeros((1, action_dim), jnp.float32)
    g = jnp.ones((1, feature_dim), jnp.float32)      # LayerNorm gamma
    beta = jnp.zeros((1, feature_dim), jnp.float32)  # LayerNorm beta
    return (w1, b1, g, beta, w2, b2, w3, b3, w4, b4)


if __name__ == "__main__":
    key = jax.random.PRNGKey(0)

    # ---- Test 1: small shapes, single-tile path -----------------------------
    batch, repr_dim, feature_dim, hidden_dim, action_dim = 8, 64, 32, 32, 4
    k_obs, k_par, key = jax.random.split(key, 3)
    obs = jax.random.normal(k_obs, (batch, repr_dim), dtype=jnp.float32)
    params = make_params(k_par, repr_dim, feature_dim, hidden_dim, action_dim)

    prepared = prepare_params(params)          # one-time weight cast/pad
    out = actor_forward(obs, prepared)
    jax.block_until_ready(out)

    assert out.shape == (batch, action_dim)
    assert bool(jnp.all(jnp.isfinite(out)))
    assert bool(jnp.all(jnp.abs(out) <= 1.0))  # final tanh bound
    ref = actor_reference(obs, params)
    assert bool(jnp.max(jnp.abs(out - ref)) < 5e-2)

    # ---- Test 2: K-tiled + ragged-K + multi-batch-tile path ----------------
    batch2, repr2, feat2, hid2, act2 = 16, 300, 50, 64, 6
    k_obs2, k_par2 = jax.random.split(key)
    obs2 = jax.random.normal(k_obs2, (batch2, repr2), dtype=jnp.float32)
    params2 = make_params(k_par2, repr2, feat2, hid2, act2)

    prepared2 = prepare_params(params2, tk_target=128)   # forces grid_k=3, ragged
    out2 = actor_forward(obs2, prepared2)
    jax.block_until_ready(out2)

    assert out2.shape == (batch2, act2)
    assert bool(jnp.all(jnp.isfinite(out2)))
    assert bool(jnp.all(jnp.abs(out2) <= 1.0))
    ref2 = actor_reference(obs2, params2)
    assert bool(jnp.max(jnp.abs(out2 - ref2)) < 7.5e-2)  # bf16 MXU tolerance

    print("KERNEL_OK")
</pallas_src>

<mosaic_0001>
module attributes {stable_mosaic.version = 11 : i64} {
  func.func @kernel(%arg0: i32, %arg1: i32, %arg2: memref<8x64xbf16, #tpu.memory_space<vmem>>, %arg3: memref<64x128xbf16, #tpu.memory_space<vmem>>, %arg4: memref<1x128xf32, #tpu.memory_space<vmem>>, %arg5: memref<1x128xf32, #tpu.memory_space<vmem>>, %arg6: memref<1x128xf32, #tpu.memory_space<vmem>>, %arg7: memref<128x128xbf16, #tpu.memory_space<vmem>>, %arg8: memref<1x128xf32, #tpu.memory_space<vmem>>, %arg9: memref<128x128xbf16, #tpu.memory_space<vmem>>, %arg10: memref<1x128xf32, #tpu.memory_space<vmem>>, %arg11: memref<128x128xbf16, #tpu.memory_space<vmem>>, %arg12: memref<1x128xf32, #tpu.memory_space<vmem>>, %arg13: memref<8x128xf32, #tpu.memory_space<vmem>>, %arg14: memref<8x128xf32, #tpu.memory_space<vmem>>) attributes {dimension_semantics = [#tpu.dimension_semantics<parallel>, #tpu.dimension_semantics<arbitrary>], iteration_bounds = array<i64: 1, 1>, scalar_prefetch = 0 : i64, scratch_operands = 1 : i64, tpu.core_type = #tpu.core_type<tc>, window_params = [{transform_indices = @transform_0, window_bounds = array<i64: 8, 64>}, {transform_indices = @transform_1, window_bounds = array<i64: 64, 128>}, {pipeline_mode = #tpu.pipeline_mode<synchronous>, transform_indices = @transform_2, window_bounds = array<i64: 1, 128>}, {pipeline_mode = #tpu.pipeline_mode<synchronous>, transform_indices = @transform_3, window_bounds = array<i64: 1, 128>}, {pipeline_mode = #tpu.pipeline_mode<synchronous>, transform_indices = @transform_4, window_bounds = array<i64: 1, 128>}, {pipeline_mode = #tpu.pipeline_mode<synchronous>, transform_indices = @transform_5, window_bounds = array<i64: 128, 128>}, {pipeline_mode = #tpu.pipeline_mode<synchronous>, transform_indices = @transform_6, window_bounds = array<i64: 1, 128>}, {pipeline_mode = #tpu.pipeline_mode<synchronous>, transform_indices = @transform_7, window_bounds = array<i64: 128, 128>}, {pipeline_mode = #tpu.pipeline_mode<synchronous>, transform_indices = @transform_8, window_bounds = array<i64: 1, 128>}, {pipeline_mode = #tpu.pipeline_mode<synchronous>, transform_indices = @transform_9, window_bounds = array<i64: 128, 128>}, {pipeline_mode = #tpu.pipeline_mode<synchronous>, transform_indices = @transform_10, window_bounds = array<i64: 1, 128>}, {transform_indices = @transform_11, window_bounds = array<i64: 8, 128>}]} {
    %c0_i32 = arith.constant 0 : i32
    %0 = arith.cmpi eq, %arg1, %c0_i32 : i32
    %1 = arith.extui %0 : i1 to i32
    %c0_i32_0 = arith.constant 0 : i32
    %2 = arith.cmpi ne, %1, %c0_i32_0 : i32
    scf.if %2 {
      %cst_10 = arith.constant 0.000000e+00 : f32
      %12 = vector.broadcast %cst_10 : f32 to vector<8x128xf32>
      %c0_11 = arith.constant 0 : index
      %c0_12 = arith.constant 0 : index
      %13 = vector.load %arg14[%c0_11, %c0_12] : memref<8x128xf32, #tpu.memory_space<vmem>>, vector<8x128xf32>
      tpu.vector_store %arg14[%c0_11, %c0_12], %12 {strides = array<i32>} : memref<8x128xf32, #tpu.memory_space<vmem>>, vector<8x128xf32>,
    } else {
    }
    %c0 = arith.constant 0 : index
    %c0_1 = arith.constant 0 : index
    %3 = vector.load %arg14[%c0, %c0_1] : memref<8x128xf32, #tpu.memory_space<vmem>>, vector<8x128xf32>
    %c0_2 = arith.constant 0 : index
    %c0_3 = arith.constant 0 : index
    %4 = vector.load %arg2[%c0_2, %c0_3] : memref<8x64xbf16, #tpu.memory_space<vmem>>, vector<8x64xbf16>
    %c0_4 = arith.constant 0 : index
    %c0_5 = arith.constant 0 : index
    %5 = vector.load %arg3[%c0_4, %c0_5] : memref<64x128xbf16, #tpu.memory_space<vmem>>, vector<64x128xbf16>
    %cst = arith.constant dense<0.000000e+00> : vector<8x128xf32>
    %6 = tpu.matmul %4, %5, %cst {dimension_numbers = #tpu.dot_dimension_numbers<[1], [0], [0], [1], [0, 0, 1, 1], [], []>} : vector<8x64xbf16>, vector<64x128xbf16>, vector<8x128xf32> -> vector<8x128xf32>
    %7 = arith.addf %3, %6 : vector<8x128xf32>
    %c0_6 = arith.constant 0 : index
    %c0_7 = arith.constant 0 : index
    %8 = vector.load %arg14[%c0_6, %c0_7] : memref<8x128xf32, #tpu.memory_space<vmem>>, vector<8x128xf32>
    tpu.vector_store %arg14[%c0_6, %c0_7], %7 {strides = array<i32>} : memref<8x128xf32, #tpu.memory_space<vmem>>, vector<8x128xf32>,
    %c0_i32_8 = arith.constant 0 : i32
    %9 = arith.cmpi eq, %arg1, %c0_i32_8 : i32
    %10 = arith.extui %9 : i1 to i32
    %c0_i32_9 = arith.constant 0 : i32
    %11 = arith.cmpi ne, %10, %c0_i32_9 : i32
    scf.if %11 {
      %c0_10 = arith.constant 0 : index
      %c0_11 = arith.constant 0 : index
      %12 = vector.load %arg14[%c0_10, %c0_11] : memref<8x128xf32, #tpu.memory_space<vmem>>, vector<8x128xf32>
      %c0_12 = arith.constant 0 : index
      %c0_13 = arith.constant 0 : index
      %13 = vector.load %arg4[%c0_12, %c0_13] : memref<1x128xf32, #tpu.memory_space<vmem>>, vector<1x128xf32>
      %14 = vector.broadcast %13 : vector<1x128xf32> to vector<8x128xf32>
      %15 = arith.addf %12, %14 : vector<8x128xf32>
      %16 = tpu.iota {dimensions = array<i32: 1>} : vector<8x128xi32>
      %c32_i32 = arith.constant 32 : i32
      %17 = vector.broadcast %c32_i32 : i32 to vector<8x128xi32>
      %18 = arith.cmpi slt, %16, %17 : vector<8x128xi32>
      %cst_14 = arith.constant 0.000000e+00 : f32
      %19 = vector.broadcast %cst_14 : f32 to vector<8x128xf32>
      %20 = arith.select %18, %15, %19 : vector<8x128xi1>, vector<8x128xf32>
      %cst_15 = arith.constant dense<0.000000e+00> : vector<8xf32>
      %21 = vector.multi_reduction <add>, %20, %cst_15 [1] : vector<8x128xf32> to vector<8xf32>
      %22 = vector.shape_cast %21 : vector<8xf32> to vector<8x1xf32>
      %cst_16 = arith.constant 3.125000e-02 : f32
      %23 = vector.broadcast %cst_16 : f32 to vector<8x1xf32>
      %24 = arith.mulf %22, %23 : vector<8x1xf32>
      %25 = vector.broadcast %24 : vector<8x1xf32> to vector<8x128xf32>
      %26 = arith.subf %20, %25 : vector<8x128xf32>
      %27 = arith.mulf %26, %26 : vector<8x128xf32>
      %cst_17 = arith.constant 0.000000e+00 : f32
      %28 = vector.broadcast %cst_17 : f32 to vector<8x128xf32>
      %29 = arith.select %18, %27, %28 : vector<8x128xi1>, vector<8x128xf32>
      %cst_18 = arith.constant dense<0.000000e+00> : vector<8xf32>
      %30 = vector.multi_reduction <add>, %29, %cst_18 [1] : vector<8x128xf32> to vector<8xf32>
      %31 = vector.shape_cast %30 : vector<8xf32> to vector<8x1xf32>
      %cst_19 = arith.constant 3.125000e-02 : f32
      %32 = vector.broadcast %cst_19 : f32 to vector<8x1xf32>
      %33 = arith.mulf %31, %32 : vector<8x1xf32>
      %cst_20 = arith.constant 9.99999974E-6 : f32
      %34 = vector.broadcast %cst_20 : f32 to vector<8x1xf32>
      %35 = arith.addf %33, %34 : vector<8x1xf32>
      %36 = math.rsqrt %35 : vector<8x1xf32>
      %37 = vector.broadcast %36 : vector<8x1xf32> to vector<8x128xf32>
      %38 = arith.mulf %26, %37 : vector<8x128xf32>
      %c0_21 = arith.constant 0 : index
      %c0_22 = arith.constant 0 : index
      %39 = vector.load %arg5[%c0_21, %c0_22] : memref<1x128xf32, #tpu.memory_space<vmem>>, vector<1x128xf32>
      %40 = vector.broadcast %39 : vector<1x128xf32> to vector<8x128xf32>
      %41 = arith.mulf %38, %40 : vector<8x128xf32>
      %c0_23 = arith.constant 0 : index
      %c0_24 = arith.constant 0 : index
      %42 = vector.load %arg6[%c0_23, %c0_24] : memref<1x128xf32, #tpu.memory_space<vmem>>, vector<1x128xf32>
      %43 = vector.broadcast %42 : vector<1x128xf32> to vector<8x128xf32>
      %44 = arith.addf %41, %43 : vector<8x128xf32>
      %45 = math.tanh %44 : vector<8x128xf32>
      %46 = arith.truncf %45 : vector<8x128xf32> to vector<8x128xbf16>
      %c0_25 = arith.constant 0 : index
      %c0_26 = arith.constant 0 : index
      %47 = vector.load %arg7[%c0_25, %c0_26] : memref<128x128xbf16, #tpu.memory_space<vmem>>, vector<128x128xbf16>
      %cst_27 = arith.constant dense<0.000000e+00> : vector<8x128xf32>
      %48 = tpu.matmul %46, %47, %cst_27 {dimension_numbers = #tpu.dot_dimension_numbers<[1], [0], [0], [1], [0, 0, 1, 1], [], []>} : vector<8x128xbf16>, vector<128x128xbf16>, vector<8x128xf32> -> vector<8x128xf32>
      %c0_28 = arith.constant 0 : index
      %c0_29 = arith.constant 0 : index
      %49 = vector.load %arg8[%c0_28, %c0_29] : memref<1x128xf32, #tpu.memory_space<vmem>>, vector<1x128xf32>
      %50 = vector.broadcast %49 : vector<1x128xf32> to vector<8x128xf32>
      %51 = arith.addf %48, %50 : vector<8x128xf32>
      %cst_30 = arith.constant 0.000000e+00 : f32
      %52 = vector.broadcast %cst_30 : f32 to vector<8x128xf32>
      %53 = arith.maximumf %51, %52 : vector<8x128xf32>
      %54 = arith.truncf %53 : vector<8x128xf32> to vector<8x128xbf16>
      %c0_31 = arith.constant 0 : index
      %c0_32 = arith.constant 0 : index
      %55 = vector.load %arg9[%c0_31, %c0_32] : memref<128x128xbf16, #tpu.memory_space<vmem>>, vector<128x128xbf16>
      %cst_33 = arith.constant dense<0.000000e+00> : vector<8x128xf32>
      %56 = tpu.matmul %54, %55, %cst_33 {dimension_numbers = #tpu.dot_dimension_numbers<[1], [0], [0], [1], [0, 0, 1, 1], [], []>} : vector<8x128xbf16>, vector<128x128xbf16>, vector<8x128xf32> -> vector<8x128xf32>
      %c0_34 = arith.constant 0 : index
      %c0_35 = arith.constant 0 : index
      %57 = vector.load %arg10[%c0_34, %c0_35] : memref<1x128xf32, #tpu.memory_space<vmem>>, vector<1x128xf32>
      %58 = vector.broadcast %57 : vector<1x128xf32> to vector<8x128xf32>
      %59 = arith.addf %56, %58 : vector<8x128xf32>
      %cst_36 = arith.constant 0.000000e+00 : f32
      %60 = vector.broadcast %cst_36 : f32 to vector<8x128xf32>
      %61 = arith.maximumf %59, %60 : vector<8x128xf32>
      %62 = arith.truncf %61 : vector<8x128xf32> to vector<8x128xbf16>
      %c0_37 = arith.constant 0 : index
      %c0_38 = arith.constant 0 : index
      %63 = vector.load %arg11[%c0_37, %c0_38] : memref<128x128xbf16, #tpu.memory_space<vmem>>, vector<128x128xbf16>
      %cst_39 = arith.constant dense<0.000000e+00> : vector<8x128xf32>
      %64 = tpu.matmul %62, %63, %cst_39 {dimension_numbers = #tpu.dot_dimension_numbers<[1], [0], [0], [1], [0, 0, 1, 1], [], []>} : vector<8x128xbf16>, vector<128x128xbf16>, vector<8x128xf32> -> vector<8x128xf32>
      %c0_40 = arith.constant 0 : index
      %c0_41 = arith.constant 0 : index
      %65 = vector.load %arg12[%c0_40, %c0_41] : memref<1x128xf32, #tpu.memory_space<vmem>>, vector<1x128xf32>
      %66 = vector.broadcast %65 : vector<1x128xf32> to vector<8x128xf32>
      %67 = arith.addf %64, %66 : vector<8x128xf32>
      %68 = math.tanh %67 : vector<8x128xf32>
      %c0_42 = arith.constant 0 : index
      %c0_43 = arith.constant 0 : index
      %69 = vector.load %arg13[%c0_42, %c0_43] : memref<8x128xf32, #tpu.memory_space<vmem>>, vector<8x128xf32>
      tpu.vector_store %arg13[%c0_42, %c0_43], %68 {strides = array<i32>} : memref<8x128xf32, #tpu.memory_space<vmem>>, vector<8x128xf32>,
    } else {
    }
    return
  }
  func.func @transform_0(%arg0: i32, %arg1: i32) -> (i32, i32) {
    %c0_i32 = arith.constant 0 : i32
    return %arg0, %arg1 : i32, i32
  }
  func.func @transform_1(%arg0: i32, %arg1: i32) -> (i32, i32) {
    %c0_i32 = arith.constant 0 : i32
    %c0_i32_0 = arith.constant 0 : i32
    return %arg1, %c0_i32 : i32, i32
  }
  func.func @transform_2(%arg0: i32, %arg1: i32) -> (i32, i32) {
    %c0_i32 = arith.constant 0 : i32
    %c0_i32_0 = arith.constant 0 : i32
    %c0_i32_1 = arith.constant 0 : i32
    return %c0_i32, %c0_i32_0 : i32, i32
  }
  func.func @transform_3(%arg0: i32, %arg1: i32) -> (i32, i32) {
    %c0_i32 = arith.constant 0 : i32
    %c0_i32_0 = arith.constant 0 : i32
    %c0_i32_1 = arith.constant 0 : i32
    return %c0_i32, %c0_i32_0 : i32, i32
  }
  func.func @transform_4(%arg0: i32, %arg1: i32) -> (i32, i32) {
    %c0_i32 = arith.constant 0 : i32
    %c0_i32_0 = arith.constant 0 : i32
    %c0_i32_1 = arith.constant 0 : i32
    return %c0_i32, %c0_i32_0 : i32, i32
  }
  func.func @transform_5(%arg0: i32, %arg1: i32) -> (i32, i32) {
    %c0_i32 = arith.constant 0 : i32
    %c0_i32_0 = arith.constant 0 : i32
    %c0_i32_1 = arith.constant 0 : i32
    return %c0_i32, %c0_i32_0 : i32, i32
  }
  func.func @transform_6(%arg0: i32, %arg1: i32) -> (i32, i32) {
    %c0_i32 = arith.constant 0 : i32
    %c0_i32_0 = arith.constant 0 : i32
    %c0_i32_1 = arith.constant 0 : i32
    return %c0_i32, %c0_i32_0 : i32, i32
  }
  func.func @transform_7(%arg0: i32, %arg1: i32) -> (i32, i32) {
    %c0_i32 = arith.constant 0 : i32
    %c0_i32_0 = arith.constant 0 : i32
    %c0_i32_1 = arith.constant 0 : i32
    return %c0_i32, %c0_i32_0 : i32, i32
  }
  func.func @transform_8(%arg0: i32, %arg1: i32) -> (i32, i32) {
    %c0_i32 = arith.constant 0 : i32
    %c0_i32_0 = arith.constant 0 : i32
    %c0_i32_1 = arith.constant 0 : i32
    return %c0_i32, %c0_i32_0 : i32, i32
  }
  func.func @transform_9(%arg0: i32, %arg1: i32) -> (i32, i32) {
    %c0_i32 = arith.constant 0 : i32
    %c0_i32_0 = arith.constant 0 : i32
    %c0_i32_1 = arith.constant 0 : i32
    return %c0_i32, %c0_i32_0 : i32, i32
  }
  func.func @transform_10(%arg0: i32, %arg1: i32) -> (i32, i32) {
    %c0_i32 = arith.constant 0 : i32
    %c0_i32_0 = arith.constant 0 : i32
    %c0_i32_1 = arith.constant 0 : i32
    return %c0_i32, %c0_i32_0 : i32, i32
  }
  func.func @transform_11(%arg0: i32, %arg1: i32) -> (i32, i32) {
    %c0_i32 = arith.constant 0 : i32
    %c0_i32_0 = arith.constant 0 : i32
    return %arg0, %c0_i32 : i32, i32
  }
}

</mosaic_0001>

<llo_original>
// kernel: tpu_custom_call.1
$region0: #{tpu_custom_call.1}
  #allocation0 [shape = 'u32[]', space=smem, size = 0x4, offset = 0x4, fixed_abs, tag = 'smem constant byte address 0x4 - core index']
  #allocation1 [shape = 'u32[144,128]{1,0:T(1,128)}', space=vmem, size = 0x12000, scoped, tag = 'internal scratch']
  #allocation2 [shape = 'f32[8,128]{1,0:T(8,128)}', space=vmem, size = 0x1000, scoped, tag = 'scratch operand']
  %s0 = inlined_call_operand.hbm [shape: bf16[8,64], index: 0, kind: input, shape index: {}]
  %s1 = inlined_call_operand.hbm [shape: bf16[64,128], index: 1, kind: input, shape index: {}]
  %s2 = inlined_call_operand.vmem [shape: f32[1,128], index: 2, kind: input, shape index: {}]
  %s3 = inlined_call_operand.vmem [shape: f32[1,128], index: 3, kind: input, shape index: {}]
  %s4 = inlined_call_operand.vmem [shape: f32[1,128], index: 4, kind: input, shape index: {}]
  %s5 = inlined_call_operand.hbm [shape: bf16[128,128], index: 5, kind: input, shape index: {}]
  %s6 = inlined_call_operand.vmem [shape: f32[1,128], index: 6, kind: input, shape index: {}]
  %s7 = inlined_call_operand.hbm [shape: bf16[128,128], index: 7, kind: input, shape index: {}]
  %s8 = inlined_call_operand.vmem [shape: f32[1,128], index: 8, kind: input, shape index: {}]
  %s9 = inlined_call_operand.hbm [shape: bf16[128,128], index: 9, kind: input, shape index: {}]
  %s10 = inlined_call_operand.vmem [shape: f32[1,128], index: 10, kind: input, shape index: {}]
  %s11 = inlined_call_operand.hbm [shape: f32[8,128], index: 11, kind: output, shape index: {}]
  %s12 = sld [smem:[#allocation0]]
  $region82: #{tpu_custom_call.1} parent=0
    _
  %s14 = ssub.s32 1, %s12
  %s15 = scalar_select 0, %s14, %s12
  $region1: #{tpu_custom_call.1} parent=0
    #allocation3 [shape = 'u8[2048]{0}', space=vmem, size = 0x800, scoped, tag = 'input window, operand 0, single buffered']
    #allocation4 [shape = 's32[1]{0}', space=sflag, size = 0x4, scoped, tag = 'scoped memory for tpu_custom_call.1']
    #allocation5 [shape = 's32[1]{0}', space=sflag, size = 0x4, scoped, tag = 'scoped memory for tpu_custom_call.1']
    #allocation6 [shape = 'u8[16384]{0}', space=vmem, size = 0x4000, scoped, tag = 'input window, operand 1, single buffered']
    #allocation7 [shape = 's32[1]{0}', space=sflag, size = 0x4, scoped, tag = 'scoped memory for tpu_custom_call.1']
    #allocation8 [shape = 'u8[32768]{0}', space=vmem, size = 0x8000, scoped, tag = 'input window, operand 5, single buffered']
    #allocation9 [shape = 'u8[32768]{0}', space=vmem, size = 0x8000, scoped, tag = 'input window, operand 7, single buffered']
    #allocation10 [shape = 's32[1]{0}', space=sflag, size = 0x4, scoped, tag = 'scoped memory for tpu_custom_call.1']
    #allocation11 [shape = 'u8[32768]{0}', space=vmem, size = 0x8000, scoped, tag = 'input window, operand 9, single buffered']
    #allocation12 [shape = 'u8[4096]{0}', space=vmem, size = 0x1000, scoped, tag = 'output window, operand 0, single buffered']
    %16 = vsyncpa [#allocation4], 0
    %17 = vsyncpa [#allocation7], 0
    %18 = vsyncpa [#allocation10], 0
    %19 = vsyncpa [#allocation5], 0
    // Predicated region
    $region2: #{tpu_custom_call.1} parent=1 // pred_check
      _
    $region3: #{tpu_custom_call.1} parent=1 // pred_check_branch
      %21 = sbr.rel (0) target = $region5
    $region4: #{tpu_custom_call.1} parent=1 // pred_region
      %s23 = ssub.s32 64, 64
      %24 = vsyncadd [#allocation4], %s23
      %s26 = sshll.u32 [#allocation3], 4
      %s27 = int_to_ptr.vmem [resolvable:$true] %s26
      %29 = dma.hbm_to_vmem [thread:$0]  %s0, 64, %s27, [#allocation4]
    $region5: #{tpu_custom_call.1} parent=1 // pred_fallthru
      _
    // Predicated region
    $region6: #{tpu_custom_call.1} parent=1 // pred_check
      _
    $region7: #{tpu_custom_call.1} parent=1 // pred_check_branch
      %31 = sbr.rel (0) target = $region9
    $region8: #{tpu_custom_call.1} parent=1 // pred_region
      %s33 = ssub.s32 512, 512
      %34 = vsyncadd [#allocation7], %s33
      %s35 = sshll.u32 [#allocation6], 4
      %s36 = int_to_ptr.vmem [resolvable:$true] %s35
      %41 = dma.hbm_to_vmem [thread:$0]  %s1, 512, %s36, [#allocation7], 64, 64, 4
    $region9: #{tpu_custom_call.1} parent=1 // pred_fallthru
      _
    // Predicated region
    $region10: #{tpu_custom_call.1} parent=1 // pred_check
      _
    $region11: #{tpu_custom_call.1} parent=1 // pred_check_branch
      %43 = sbr.rel (0) target = $region13
    $region12: #{tpu_custom_call.1} parent=1 // pred_region
      _
    $region13: #{tpu_custom_call.1} parent=1 // pred_fallthru
      _
    // Predicated region
    $region14: #{tpu_custom_call.1} parent=1 // pred_check
      _
    $region15: #{tpu_custom_call.1} parent=1 // pred_check_branch
      %45 = sbr.rel (0) target = $region17
    $region16: #{tpu_custom_call.1} parent=1 // pred_region
      _
    $region17: #{tpu_custom_call.1} parent=1 // pred_fallthru
      _
    // Predicated region
    $region18: #{tpu_custom_call.1} parent=1 // pred_check
      _
    $region19: #{tpu_custom_call.1} parent=1 // pred_check_branch
      %47 = sbr.rel (0) target = $region21
    $region20: #{tpu_custom_call.1} parent=1 // pred_region
      _
    $region21: #{tpu_custom_call.1} parent=1 // pred_fallthru
      _
    // Predicated region
    $region22: #{tpu_custom_call.1} parent=1 // pred_check
      _
    $region23: #{tpu_custom_call.1} parent=1 // pred_check_branch
      %49 = sbr.rel (0) target = $region25
    $region24: #{tpu_custom_call.1} parent=1 // pred_region
      %s51 = ssub.s32 1024, 1024
      %52 = vsyncadd [#allocation7], %s51
      %s53 = sshll.u32 [#allocation8], 4
      %s54 = int_to_ptr.vmem [resolvable:$true] %s53
      %59 = dma.hbm_to_vmem [thread:$0]  %s5, 1024, %s54, [#allocation7], 64, 64, 4
    $region25: #{tpu_custom_call.1} parent=1 // pred_fallthru
      _
    // Predicated region
    $region26: #{tpu_custom_call.1} parent=1 // pred_check
      _
    $region27: #{tpu_custom_call.1} parent=1 // pred_check_branch
      %61 = sbr.rel (0) target = $region29
    $region28: #{tpu_custom_call.1} parent=1 // pred_region
      _
    $region29: #{tpu_custom_call.1} parent=1 // pred_fallthru
      _
    // Predicated region
    $region30: #{tpu_custom_call.1} parent=1 // pred_check
      _
    $region31: #{tpu_custom_call.1} parent=1 // pred_check_branch
      %63 = sbr.rel (0) target = $region33
    $region32: #{tpu_custom_call.1} parent=1 // pred_region
      %s65 = ssub.s32 1024, 1024
      %66 = vsyncadd [#allocation10], %s65
      %s67 = sshll.u32 [#allocation9], 4
      %s68 = int_to_ptr.vmem [resolvable:$true] %s67
      %73 = dma.hbm_to_vmem [thread:$0]  %s7, 1024, %s68, [#allocation10], 64, 64, 4
    $region33: #{tpu_custom_call.1} parent=1 // pred_fallthru
      _
    // Predicated region
    $region34: #{tpu_custom_call.1} parent=1 // pred_check
      _
    $region35: #{tpu_custom_call.1} parent=1 // pred_check_branch
      %75 = sbr.rel (0) target = $region37
    $region36: #{tpu_custom_call.1} parent=1 // pred_region
      _
    $region37: #{tpu_custom_call.1} parent=1 // pred_fallthru
      _
    // Predicated region
    $region38: #{tpu_custom_call.1} parent=1 // pred_check
      _
    $region39: #{tpu_custom_call.1} parent=1 // pred_check_branch
      %77 = sbr.rel (0) target = $region41
    $region40: #{tpu_custom_call.1} parent=1 // pred_region
      %s79 = ssub.s32 1024, 1024
      %80 = vsyncadd [#allocation10], %s79
      %s81 = sshll.u32 [#allocation11], 4
      %s82 = int_to_ptr.vmem [resolvable:$true] %s81
      %87 = dma.hbm_to_vmem [thread:$0]  %s9, 1024, %s82, [#allocation10], 64, 64, 4
    $region41: #{tpu_custom_call.1} parent=1 // pred_fallthru
      _
    // Predicated region
    $region42: #{tpu_custom_call.1} parent=1 // pred_check
      _
    $region43: #{tpu_custom_call.1} parent=1 // pred_check_branch
      %89 = sbr.rel (0) target = $region45
    $region44: #{tpu_custom_call.1} parent=1 // pred_region
      _
    $region45: #{tpu_custom_call.1} parent=1 // pred_fallthru
      _
    // Predicated region
    $region46: #{tpu_custom_call.1} parent=1 // pred_check
      _
    $region47: #{tpu_custom_call.1} parent=1 // pred_check_branch
      %91 = sbr.rel (0) target = $region49
    $region48: #{tpu_custom_call.1} parent=1 // pred_region
      %92 = dma.done [#allocation4], 64
    $region49: #{tpu_custom_call.1} parent=1 // pred_fallthru
      _
    // Predicated region
    $region50: #{tpu_custom_call.1} parent=1 // pred_check
      _
    $region51: #{tpu_custom_call.1} parent=1 // pred_check_branch
      %94 = sbr.rel (0) target = $region53
    $region52: #{tpu_custom_call.1} parent=1 // pred_region
      %95 = dma.done [#allocation7], 512
    $region53: #{tpu_custom_call.1} parent=1 // pred_fallthru
      _
    // Predicated region
    $region54: #{tpu_custom_call.1} parent=1 // pred_check
      _
    $region55: #{tpu_custom_call.1} parent=1 // pred_check_branch
      %97 = sbr.rel (0) target = $region57
    $region56: #{tpu_custom_call.1} parent=1 // pred_region
      %98 = dma.done [#allocation7], 1024
    $region57: #{tpu_custom_call.1} parent=1 // pred_fallthru
      _
    // Predicated region
    $region58: #{tpu_custom_call.1} parent=1 // pred_check
      _
    $region59: #{tpu_custom_call.1} parent=1 // pred_check_branch
      %100 = sbr.rel (0) target = $region61
    $region60: #{tpu_custom_call.1} parent=1 // pred_region
      %101 = dma.done [#allocation10], 1024
    $region61: #{tpu_custom_call.1} parent=1 // pred_fallthru
      _
    // Predicated region
    $region62: #{tpu_custom_call.1} parent=1 // pred_check
      _
    $region63: #{tpu_custom_call.1} parent=1 // pred_check_branch
      %103 = sbr.rel (0) target = $region65
    $region64: #{tpu_custom_call.1} parent=1 // pred_region
      %104 = dma.done [#allocation10], 1024
    $region65: #{tpu_custom_call.1} parent=1 // pred_fallthru
      _
    %p106 = scmp.eq.s32.totalorder 0, 0
    // Predicated region
    $region66: #{tpu_custom_call.1} parent=1 // pred_check
      %p107 = pneg %p106
    $region67: #{tpu_custom_call.1} parent=1 // pred_check_branch
      %109 = sbr.rel (%p107) target = $region69
    $region68: #{tpu_custom_call.1} parent=1 // pred_region
      %110 = vst [vmem:[#allocation2] sm:$0xff] 0.0
    $region69: #{tpu_custom_call.1} parent=1 // pred_fallthru
      _
    %v111 = vld [vmem:[#allocation2] sm:$0xff]
    %v112 = vld [vmem:[#allocation3] sm:$0xf]
    %v113 = vld [vmem:[#allocation6] sm:$0xf]
    %v114 = vld [vmem:[#allocation6 + $0x4] sm:$0xf]
    %v115 = vld [vmem:[#allocation6 + $0x8] sm:$0xf]
    %v116 = vld [vmem:[#allocation6 + $0xc] sm:$0xf]
    %v117 = vld [vmem:[#allocation6 + $0x10] sm:$0xf]
    %v118 = vld [vmem:[#allocation6 + $0x14] sm:$0xf]
    %v119 = vld [vmem:[#allocation6 + $0x18] sm:$0xf]
    %v120 = vld [vmem:[#allocation6 + $0x1c] sm:$0xf]
    %v129 = vunpack.c.l.b16 %v113
    %v130 = vunpack.c.l.b16 %v114
    %v131 = vunpack.c.l.b16 %v115
    %v132 = vunpack.c.l.b16 %v116
    %v133 = vunpack.c.l.b16 %v117
    %v134 = vunpack.c.l.b16 %v118
    %v135 = vunpack.c.l.b16 %v119
    %v136 = vunpack.c.l.b16 %v120
    %v137 = vpack.c.b16 %v130, %v129
    %v138 = vpack.c.b16 %v132, %v131
    %v139 = vpack.c.b16 %v134, %v133
    %v140 = vpack.c.b16 %v136, %v135
    %vm145 = vcmask 523264
    %v147 = vsel %vm145, %v112, 0
    %149 = vmatprep.subr.bf16.mxu0 0
    %150 = vmatpush1.bf16.msra.mxu0 %v137
    %151 = vmatprep.subr.bf16.mxu0 0
    %152 = vmatpush1.bf16.msra.mxu0 %v138
    %153 = vmatprep.subr.bf16.mxu0 0
    %154 = vmatpush1.bf16.msra.mxu0 %v139
    %155 = vmatprep.subr.bf16.mxu0 0
    %156 = vmatpush1.bf16.msra.mxu0 %v140
    %157 = vmatprep.subr.bf16.mxu0 0
    %158 = vmatpush1.bf16.msra.mxu0 0
    %159 = vmatprep.subr.bf16.mxu0 0
    %160 = vmatpush1.bf16.msra.mxu0 0
    %161 = vmatprep.subr.bf16.mxu0 0
    %162 = vmatpush1.bf16.msra.mxu0 0
    %163 = vmatprep.subr.bf16.mxu0 0
    %164 = vmatpush1.bf16.msra.mxu0 0
    %165 = vmatprep.subr.bf16.mxu0 0
    %166 = vmatpush1.bf16.msra.mxu0 0
    %167 = vmatprep.subr.bf16.mxu0 0
    %168 = vmatpush1.bf16.msra.mxu0 0
    %169 = vmatprep.subr.bf16.mxu0 0
    %170 = vmatpush1.bf16.msra.mxu0 0
    %171 = vmatprep.subr.bf16.mxu0 0
    %172 = vmatpush1.bf16.msra.mxu0 0
    %173 = vmatprep.subr.bf16.mxu0 0
    %174 = vmatpush1.bf16.msra.mxu0 0
    %175 = vmatprep.subr.bf16.mxu0 0
    %176 = vmatpush1.bf16.msra.mxu0 0
    %177 = vmatprep.subr.bf16.mxu0 0
    %178 = vmatpush1.bf16.msra.mxu0 0
    %179 = vmatprep.subr.bf16.mxu0 0
    %180 = vmatpush1.bf16.msra.mxu0 0
    %181 = vmatprep.mubr.bf16.mxu0 0
    %182 = vmatmul.mubr.bf16.gmra.mrb[0].mxu0 %v147
    %v183 = vpop.f32.mrb[0].mxu0
    %v184 = vadd.f32 0.0, %v183
    %v185 = vpop.f32.mrb[0].mxu0
    %v186 = vpop.f32.mrb[0].mxu0
    %v187 = vpop.f32.mrb[0].mxu0
    %188 = vdwg.mxu0
    %v189 = vadd.f32 %v111, %v184
    %190 = vst [vmem:[#allocation2] sm:$0xff] %v189
    // Predicated region
    $region70: #{tpu_custom_call.1} parent=1 // pred_check
      %p191 = pneg %p106
    $region71: #{tpu_custom_call.1} parent=1 // pred_check_branch
      %193 = sbr.rel (%p191) target = $region73
    $region72: #{tpu_custom_call.1} parent=1 // pred_region
      %v194 = vld [vmem:[#allocation2] sm:$0xff]
      %v195 = vld [vmem:[%s2] sm:$0x1]
      %v197 = vlaneseq
      %v198 = vshrl.u32 %v197, 7
      %v199 = vsub.s32 0, %v198
      %v200 = vrot.slane %v195, %v199
      %v202 = vadd.f32 %v194, %v200
      %v203 = vlaneseq
      %v204 = vand.u32 %v203, 127
      %vm205 = vcmp.lt.s32.totalorder %v204, 32
      %v206 = vsel %vm205, %v202, 0.0
      %207 = vadd.xlane.f32.xlu0 %v206
      %v208 = vpop.xlane.xlu0 %207
      %v209 = vmul.f32 %v208, 0.03125
      %v210 = vsub.f32 %v206, %v209
      %v211 = vmul.f32 %v210, %v210
      %v212 = vsel %vm205, %v211, 0.0
      %213 = vadd.xlane.f32.xlu0 %v212
      %v214 = vpop.xlane.xlu0 %213
      %v215 = vmul.f32 %v214, 0.03125
      %v216 = vadd.f32 %v215, 1e-05
      %v217 = vrsqrt.pop %v216
      %v218 = vmul.f32 %v210, %v217
      %v219 = vld [vmem:[%s3] sm:$0x1]
      %v221 = vlaneseq
      %v222 = vshrl.u32 %v221, 7
      %v223 = vsub.s32 0, %v222
      %v224 = vrot.slane %v219, %v223
      %v226 = vmul.f32 %v218, %v224
      %v227 = vld [vmem:[%s4] sm:$0x1]
      %v229 = vlaneseq
      %v230 = vshrl.u32 %v229, 7
      %v231 = vsub.s32 0, %v230
      %v232 = vrot.slane %v227, %v231
      %v234 = vadd.f32 %v226, %v232
      %v235 = vtanh.pop %v234
      %v236 = vpack.c.bf16 %v235, %v235
      %v237 = vld [vmem:[#allocation8] sm:$0xf]
      %v238 = vld [vmem:[#allocation8 + $0x4] sm:$0xf]
      %v239 = vld [vmem:[#allocation8 + $0x8] sm:$0xf]
      %v240 = vld [vmem:[#allocation8 + $0xc] sm:$0xf]
      %v241 = vld [vmem:[#allocation8 + $0x10] sm:$0xf]
      %v242 = vld [vmem:[#allocation8 + $0x14] sm:$0xf]
      %v243 = vld [vmem:[#allocation8 + $0x18] sm:$0xf]
      %v244 = vld [vmem:[#allocation8 + $0x1c] sm:$0xf]
      %v245 = vld [vmem:[#allocation8 + $0x20] sm:$0xf]
      %v246 = vld [vmem:[#allocation8 + $0x24] sm:$0xf]
      %v247 = vld [vmem:[#allocation8 + $0x28] sm:$0xf]
      %v248 = vld [vmem:[#allocation8 + $0x2c] sm:$0xf]
      %v249 = vld [vmem:[#allocation8 + $0x30] sm:$0xf]
      %v250 = vld [vmem:[#allocation8 + $0x34] sm:$0xf]
      %v251 = vld [vmem:[#allocation8 + $0x38] sm:$0xf]
      %v252 = vld [vmem:[#allocation8 + $0x3c] sm:$0xf]
      %v253 = vld [vmem:[%s6] sm:$0x1]
      %v255 = vlaneseq
      %v256 = vshrl.u32 %v255, 7
      %v257 = vsub.s32 0, %v256
      %v258 = vrot.slane %v253, %v257
      %v276 = vunpack.c.l.b16 %v237
      %v277 = vunpack.c.l.b16 %v238
      %v278 = vunpack.c.l.b16 %v239
      %v279 = vunpack.c.l.b16 %v240
      %v280 = vunpack.c.l.b16 %v241
      %v281 = vunpack.c.l.b16 %v242
      %v282 = vunpack.c.l.b16 %v243
      %v283 = vunpack.c.l.b16 %v244
      %v284 = vunpack.c.l.b16 %v245
      %v285 = vunpack.c.l.b16 %v246
      %v286 = vunpack.c.l.b16 %v247
      %v287 = vunpack.c.l.b16 %v248
      %v288 = vunpack.c.l.b16 %v249
      %v289 = vunpack.c.l.b16 %v250
      %v290 = vunpack.c.l.b16 %v251
      %v291 = vunpack.c.l.b16 %v252
      %v292 = vpack.c.b16 %v277, %v276
      %v293 = vpack.c.b16 %v279, %v278
      %v294 = vpack.c.b16 %v281, %v280
      %v295 = vpack.c.b16 %v283, %v282
      %v296 = vpack.c.b16 %v285, %v284
      %v297 = vpack.c.b16 %v287, %v286
      %v298 = vpack.c.b16 %v289, %v288
      %v299 = vpack.c.b16 %v291, %v290
      %308 = vmatprep.subr.bf16.mxu0 0
      %309 = vmatpush1.bf16.msra.mxu0 %v292
      %310 = vmatprep.subr.bf16.mxu0 0
      %311 = vmatpush1.bf16.msra.mxu0 %v293
      %312 = vmatprep.subr.bf16.mxu0 0
      %313 = vmatpush1.bf16.msra.mxu0 %v294
      %314 = vmatprep.subr.bf16.mxu0 0
      %315 = vmatpush1.bf16.msra.mxu0 %v295
      %316 = vmatprep.subr.bf16.mxu0 0
      %317 = vmatpush1.bf16.msra.mxu0 %v296
      %318 = vmatprep.subr.bf16.mxu0 0
      %319 = vmatpush1.bf16.msra.mxu0 %v297
      %320 = vmatprep.subr.bf16.mxu0 0
      %321 = vmatpush1.bf16.msra.mxu0 %v298
      %322 = vmatprep.subr.bf16.mxu0 0
      %323 = vmatpush1.bf16.msra.mxu0 %v299
      %324 = vmatprep.subr.bf16.mxu0 0
      %325 = vmatpush1.bf16.msra.mxu0 0
      %326 = vmatprep.subr.bf16.mxu0 0
      %327 = vmatpush1.bf16.msra.mxu0 0
      %328 = vmatprep.subr.bf16.mxu0 0
      %329 = vmatpush1.bf16.msra.mxu0 0
      %330 = vmatprep.subr.bf16.mxu0 0
      %331 = vmatpush1.bf16.msra.mxu0 0
      %332 = vmatprep.subr.bf16.mxu0 0
      %333 = vmatpush1.bf16.msra.mxu0 0
      %334 = vmatprep.subr.bf16.mxu0 0
      %335 = vmatpush1.bf16.msra.mxu0 0
      %336 = vmatprep.subr.bf16.mxu0 0
      %337 = vmatpush1.bf16.msra.mxu0 0
      %338 = vmatprep.subr.bf16.mxu0 0
      %339 = vmatpush1.bf16.msra.mxu0 0
      %340 = vmatprep.mubr.bf16.mxu0 0
      %341 = vmatmul.mubr.bf16.gmra.mrb[0].mxu0 %v236
      %v342 = vpop.f32.mrb[0].mxu0
      %v343 = vadd.f32 %v258, %v342
      %v344 = vpop.f32.mrb[0].mxu0
      %v345 = vpop.f32.mrb[0].mxu0
      %v346 = vpop.f32.mrb[0].mxu0
      %347 = vdwg.mxu0
      %v348 = vmax.f32 %v343, 0.0
      %v349 = vpack.c.bf16 %v348, %v348
      %v350 = vld [vmem:[#allocation9] sm:$0xf]
      %v351 = vld [vmem:[#allocation9 + $0x4] sm:$0xf]
      %v352 = vld [vmem:[#allocation9 + $0x8] sm:$0xf]
      %v353 = vld [vmem:[#allocation9 + $0xc] sm:$0xf]
      %v354 = vld [vmem:[#allocation9 + $0x10] sm:$0xf]
      %v355 = vld [vmem:[#allocation9 + $0x14] sm:$0xf]
      %v356 = vld [vmem:[#allocation9 + $0x18] sm:$0xf]
      %v357 = vld [vmem:[#allocation9 + $0x1c] sm:$0xf]
      %v358 = vld [vmem:[#allocation9 + $0x20] sm:$0xf]
      %v359 = vld [vmem:[#allocation9 + $0x24] sm:$0xf]
      %v360 = vld [vmem:[#allocation9 + $0x28] sm:$0xf]
      %v361 = vld [vmem:[#allocation9 + $0x2c] sm:$0xf]
      %v362 = vld [vmem:[#allocation9 + $0x30] sm:$0xf]
      %v363 = vld [vmem:[#allocation9 + $0x34] sm:$0xf]
      %v364 = vld [vmem:[#allocation9 + $0x38] sm:$0xf]
      %v365 = vld [vmem:[#allocation9 + $0x3c] sm:$0xf]
      %v366 = vld [vmem:[%s8] sm:$0x1]
      %v368 = vlaneseq
      %v369 = vshrl.u32 %v368, 7
      %v370 = vsub.s32 0, %v369
      %v371 = vrot.slane %v366, %v370
      %v389 = vunpack.c.l.b16 %v350
      %v390 = vunpack.c.l.b16 %v351
      %v391 = vunpack.c.l.b16 %v352
      %v392 = vunpack.c.l.b16 %v353
      %v393 = vunpack.c.l.b16 %v354
      %v394 = vunpack.c.l.b16 %v355
      %v395 = vunpack.c.l.b16 %v356
      %v396 = vunpack.c.l.b16 %v357
      %v397 = vunpack.c.l.b16 %v358
      %v398 = vunpack.c.l.b16 %v359
      %v399 = vunpack.c.l.b16 %v360
      %v400 = vunpack.c.l.b16 %v361
      %v401 = vunpack.c.l.b16 %v362
      %v402 = vunpack.c.l.b16 %v363
      %v403 = vunpack.c.l.b16 %v364
      %v404 = vunpack.c.l.b16 %v365
      %v405 = vpack.c.b16 %v390, %v389
      %v406 = vpack.c.b16 %v392, %v391
      %v407 = vpack.c.b16 %v394, %v393
      %v408 = vpack.c.b16 %v396, %v395
      %v409 = vpack.c.b16 %v398, %v397
      %v410 = vpack.c.b16 %v400, %v399
      %v411 = vpack.c.b16 %v402, %v401
      %v412 = vpack.c.b16 %v404, %v403
      %421 = vmatprep.subr.bf16.mxu0 0
      %422 = vmatpush1.bf16.msra.mxu0 %v405
      %423 = vmatprep.subr.bf16.mxu0 0
      %424 = vmatpush1.bf16.msra.mxu0 %v406
      %425 = vmatprep.subr.bf16.mxu0 0
      %426 = vmatpush1.bf16.msra.mxu0 %v407
      %427 = vmatprep.subr.bf16.mxu0 0
      %428 = vmatpush1.bf16.msra.mxu0 %v408
      %429 = vmatprep.subr.bf16.mxu0 0
      %430 = vmatpush1.bf16.msra.mxu0 %v409
      %431 = vmatprep.subr.bf16.mxu0 0
      %432 = vmatpush1.bf16.msra.mxu0 %v410
      %433 = vmatprep.subr.bf16.mxu0 0
      %434 = vmatpush1.bf16.msra.mxu0 %v411
      %435 = vmatprep.subr.bf16.mxu0 0
      %436 = vmatpush1.bf16.msra.mxu0 %v412
      %437 = vmatprep.subr.bf16.mxu0 0
      %438 = vmatpush1.bf16.msra.mxu0 0
      %439 = vmatprep.subr.bf16.mxu0 0
      %440 = vmatpush1.bf16.msra.mxu0 0
      %441 = vmatprep.subr.bf16.mxu0 0
      %442 = vmatpush1.bf16.msra.mxu0 0
      %443 = vmatprep.subr.bf16.mxu0 0
      %444 = vmatpush1.bf16.msra.mxu0 0
      %445 = vmatprep.subr.bf16.mxu0 0
      %446 = vmatpush1.bf16.msra.mxu0 0
      %447 = vmatprep.subr.bf16.mxu0 0
      %448 = vmatpush1.bf16.msra.mxu0 0
      %449 = vmatprep.subr.bf16.mxu0 0
      %450 = vmatpush1.bf16.msra.mxu0 0
      %451 = vmatprep.subr.bf16.mxu0 0
      %452 = vmatpush1.bf16.msra.mxu0 0
      %453 = vmatprep.mubr.bf16.mxu0 0
      %454 = vmatmul.mubr.bf16.gmra.mrb[0].mxu0 %v349
      %v455 = vpop.f32.mrb[0].mxu0
      %v456 = vadd.f32 %v371, %v455
      %v457 = vpop.f32.mrb[0].mxu0
      %v458 = vpop.f32.mrb[0].mxu0
      %v459 = vpop.f32.mrb[0].mxu0
      %460 = vdwg.mxu0
      %v461 = vmax.f32 %v456, 0.0
      %v462 = vpack.c.bf16 %v461, %v461
      %v463 = vld [vmem:[#allocation11] sm:$0xf]
      %v464 = vld [vmem:[#allocation11 + $0x4] sm:$0xf]
      %v465 = vld [vmem:[#allocation11 + $0x8] sm:$0xf]
      %v466 = vld [vmem:[#allocation11 + $0xc] sm:$0xf]
      %v467 = vld [vmem:[#allocation11 + $0x10] sm:$0xf]
      %v468 = vld [vmem:[#allocation11 + $0x14] sm:$0xf]
      %v469 = vld [vmem:[#allocation11 + $0x18] sm:$0xf]
      %v470 = vld [vmem:[#allocation11 + $0x1c] sm:$0xf]
      %v471 = vld [vmem:[#allocation11 + $0x20] sm:$0xf]
      %v472 = vld [vmem:[#allocation11 + $0x24] sm:$0xf]
      %v473 = vld [vmem:[#allocation11 + $0x28] sm:$0xf]
      %v474 = vld [vmem:[#allocation11 + $0x2c] sm:$0xf]
      %v475 = vld [vmem:[#allocation11 + $0x30] sm:$0xf]
      %v476 = vld [vmem:[#allocation11 + $0x34] sm:$0xf]
      %v477 = vld [vmem:[#allocation11 + $0x38] sm:$0xf]
      %v478 = vld [vmem:[#allocation11 + $0x3c] sm:$0xf]
      %v479 = vld [vmem:[%s10] sm:$0x1]
      %v481 = vlaneseq
      %v482 = vshrl.u32 %v481, 7
      %v483 = vsub.s32 0, %v482
      %v484 = vrot.slane %v479, %v483
      %v502 = vunpack.c.l.b16 %v463
      %v503 = vunpack.c.l.b16 %v464
      %v504 = vunpack.c.l.b16 %v465
      %v505 = vunpack.c.l.b16 %v466
      %v506 = vunpack.c.l.b16 %v467
      %v507 = vunpack.c.l.b16 %v468
      %v508 = vunpack.c.l.b16 %v469
      %v509 = vunpack.c.l.b16 %v470
      %v510 = vunpack.c.l.b16 %v471
      %v511 = vunpack.c.l.b16 %v472
      %v512 = vunpack.c.l.b16 %v473
      %v513 = vunpack.c.l.b16 %v474
      %v514 = vunpack.c.l.b16 %v475
      %v515 = vunpack.c.l.b16 %v476
      %v516 = vunpack.c.l.b16 %v477
      %v517 = vunpack.c.l.b16 %v478
      %v518 = vpack.c.b16 %v503, %v502
      %v519 = vpack.c.b16 %v505, %v504
      %v520 = vpack.c.b16 %v507, %v506
      %v521 = vpack.c.b16 %v509, %v508
      %v522 = vpack.c.b16 %v511, %v510
      %v523 = vpack.c.b16 %v513, %v512
      %v524 = vpack.c.b16 %v515, %v514
      %v525 = vpack.c.b16 %v517, %v516
      %534 = vmatprep.subr.bf16.mxu0 0
      %535 = vmatpush1.bf16.msra.mxu0 %v518
      %536 = vmatprep.subr.bf16.mxu0 0
      %537 = vmatpush1.bf16.msra.mxu0 %v519
      %538 = vmatprep.subr.bf16.mxu0 0
      %539 = vmatpush1.bf16.msra.mxu0 %v520
      %540 = vmatprep.subr.bf16.mxu0 0
      %541 = vmatpush1.bf16.msra.mxu0 %v521
      %542 = vmatprep.subr.bf16.mxu0 0
      %543 = vmatpush1.bf16.msra.mxu0 %v522
      %544 = vmatprep.subr.bf16.mxu0 0
      %545 = vmatpush1.bf16.msra.mxu0 %v523
      %546 = vmatprep.subr.bf16.mxu0 0
      %547 = vmatpush1.bf16.msra.mxu0 %v524
      %548 = vmatprep.subr.bf16.mxu0 0
      %549 = vmatpush1.bf16.msra.mxu0 %v525
      %550 = vmatprep.subr.bf16.mxu0 0
      %551 = vmatpush1.bf16.msra.mxu0 0
      %552 = vmatprep.subr.bf16.mxu0 0
      %553 = vmatpush1.bf16.msra.mxu0 0
      %554 = vmatprep.subr.bf16.mxu0 0
      %555 = vmatpush1.bf16.msra.mxu0 0
      %556 = vmatprep.subr.bf16.mxu0 0
      %557 = vmatpush1.bf16.msra.mxu0 0
      %558 = vmatprep.subr.bf16.mxu0 0
      %559 = vmatpush1.bf16.msra.mxu0 0
      %560 = vmatprep.subr.bf16.mxu0 0
      %561 = vmatpush1.bf16.msra.mxu0 0
      %562 = vmatprep.subr.bf16.mxu0 0
      %563 = vmatpush1.bf16.msra.mxu0 0
      %564 = vmatprep.subr.bf16.mxu0 0
      %565 = vmatpush1.bf16.msra.mxu0 0
      %566 = vmatprep.mubr.bf16.mxu0 0
      %567 = vmatmul.mubr.bf16.gmra.mrb[0].mxu0 %v462
      %v568 = vpop.f32.mrb[0].mxu0
      %v569 = vadd.f32 %v484, %v568
      %v570 = vpop.f32.mrb[0].mxu0
      %v571 = vpop.f32.mrb[0].mxu0
      %v572 = vpop.f32.mrb[0].mxu0
      %573 = vdwg.mxu0
      %v574 = vtanh.pop %v569
      %575 = vst [vmem:[#allocation12] sm:$0xff] %v574
    $region73: #{tpu_custom_call.1} parent=1 // pred_fallthru
      _
    // Predicated region
    $region74: #{tpu_custom_call.1} parent=1 // pred_check
      _
    $region75: #{tpu_custom_call.1} parent=1 // pred_check_branch
      %577 = sbr.rel (0) target = $region77
    $region76: #{tpu_custom_call.1} parent=1 // pred_region
      %s579 = ssub.s32 128, 128
      %580 = vsyncadd [#allocation5], %s579
      %s582 = sshll.u32 [#allocation12], 4
      %s583 = int_to_ptr.vmem [resolvable:$true] %s582
      %585 = dma.vmem_to_hbm [thread:$0]  %s583, 128, %s11, [#allocation5]
    $region77: #{tpu_custom_call.1} parent=1 // pred_fallthru
      _
    // Predicated region
    $region78: #{tpu_custom_call.1} parent=1 // pred_check
      _
    $region79: #{tpu_custom_call.1} parent=1 // pred_check_branch
      %587 = sbr.rel (0) target = $region81
    $region80: #{tpu_custom_call.1} parent=1 // pred_region
      %588 = dma.done [#allocation5], 128
    $region81: #{tpu_custom_call.1} parent=1 // pred_fallthru
      _
    %589 = vsyncpa [#allocation4], 1
    %590 = vsyncpa [#allocation7], 1
    %591 = vsyncpa [#allocation10], 1
    %592 = vsyncpa [#allocation5], 1

</llo_original>
